<compile_context>
chip_gen: v6e
topology: v6e:2x2x1
jax: 0.10.0
libtpu: 0.0.40
codegen_flags: <defaults>
</compile_context>

<pallas_src>
import functools
import math

import jax
import jax.numpy as jnp
from jax.experimental import pallas as pl
from jax.experimental.pallas import tpu as pltpu

_LANE = 128
_TARGET_DMA_BYTES = 2 * 1024 * 1024     # per-DMA chunk on the HBM->HBM path
_MAX_CONCURRENT_DMAS = 16               # descriptors issued back-to-back
_MIN_TAIL_BYTES = 256 * 1024            # fold smaller ragged tails into prev chunk


# ----------------------------------------------------------------------------
# shape utilities
# ----------------------------------------------------------------------------
def _normalize_dims(dims):
    if len(dims) == 1 and isinstance(dims[0], (tuple, list)):
        return tuple(int(d) for d in dims[0])
    return tuple(int(d) for d in dims)


def _resolve_dims(total, dims):
    """Replicate torch.view's -1 inference."""
    dims = list(dims)
    if dims.count(-1) > 1:
        raise ValueError("only one dimension can be inferred")
    if -1 in dims:
        known = 1
        for d in dims:
            if d != -1:
                known *= d
        if known == 0 or total % known != 0:
            raise ValueError(f"shape {dims} is invalid for input of size {total}")
        dims[dims.index(-1)] = total // known
    if math.prod(dims) != total:
        raise ValueError(f"shape {dims} is invalid for input of size {total}")
    return tuple(dims)


def _sublane(dtype):
    # Sub-32-bit dtypes pack along sublanes: 8 rows (f32), 16 (bf16), 32 (int8).
    itemsize = jnp.dtype(dtype).itemsize
    return max(8, 32 // max(itemsize, 1))


# ----------------------------------------------------------------------------
# Path A: aliased identity (no data movement)
# ----------------------------------------------------------------------------
def _alias_kernel(x_hbm, o_hbm):
    # Output buffer aliases the input buffer: torch.view shares storage, so no
    # data movement is needed.  touch() gives the output a fake read+write so
    # the otherwise-empty kernel is kept and ordered.
    pltpu.touch(o_hbm)


@functools.lru_cache(maxsize=None)
def _build_alias_identity(total, dtype_name):
    dtype = jnp.dtype(dtype_name)
    return pl.pallas_call(
        _alias_kernel,
        out_shape=jax.ShapeDtypeStruct((total,), dtype),
        in_specs=[pl.BlockSpec(memory_space=pl.ANY)],
        out_specs=pl.BlockSpec(memory_space=pl.ANY),
        input_output_aliases={0: 0},
        compiler_params=pltpu.CompilerParams(has_side_effects=True),
    )


def _alias_identity(flat, total):
    return _build_alias_identity(total, jnp.dtype(flat.dtype).name)(flat)


# ----------------------------------------------------------------------------
# Path B: chunked HBM -> HBM DMA (no VMEM round-trip)
# ----------------------------------------------------------------------------
def _make_dma_kernel(chunks):
    def kernel(x_hbm, o_hbm, sem):
        copies = []
        for c, (start, size) in enumerate(chunks):       # static unroll
            cp = pltpu.make_async_copy(
                x_hbm.at[pl.ds(start, size)],
                o_hbm.at[pl.ds(start, size)],
                sem.at[c],
            )
            cp.start()                                   # all DMAs in flight
            copies.append(cp)
        for cp in copies:
            cp.wait()
    return kernel


def _plan_dma_chunks(total, dtype):
    itemsize = jnp.dtype(dtype).itemsize
    align = _sublane(dtype) * _LANE          # one (sublane-pack x 128) memory tile
    total_bytes = total * itemsize
    n = max(1, min(_MAX_CONCURRENT_DMAS, total_bytes // _TARGET_DMA_BYTES))
    per = -(-total // n)
    per = -(-per // align) * align           # chunk starts on tile boundaries
    chunks = []
    start = 0
    while start < total:
        size = min(per, total - start)       # ragged tail allowed
        chunks.append([start, size])
        start += size
    # Fold a tiny ragged tail into the previous chunk: a sub-tile DMA adds
    # pure descriptor issue/wait latency for no bandwidth.
    if len(chunks) > 1 and chunks[-1][1] * itemsize < _MIN_TAIL_BYTES:
        tail = chunks.pop()
        chunks[-1][1] += tail[1]
    return tuple((s, z) for s, z in chunks)


@functools.lru_cache(maxsize=None)
def _build_dma_copy(total, dtype_name, chunks):
    dtype = jnp.dtype(dtype_name)
    return pl.pallas_call(
        _make_dma_kernel(chunks),
        out_shape=jax.ShapeDtypeStruct((total,), dtype),
        in_specs=[pl.BlockSpec(memory_space=pl.ANY)],    # stay in HBM
        out_specs=pl.BlockSpec(memory_space=pl.ANY),     # allocated in HBM
        scratch_shapes=[pltpu.SemaphoreType.DMA((len(chunks),))],
    )


def _dma_copy(flat, total):
    chunks = _plan_dma_chunks(total, flat.dtype)
    return _build_dma_copy(total, jnp.dtype(flat.dtype).name, chunks)(flat)


# ----------------------------------------------------------------------------
# Path C: BlockSpec-pipelined VMEM copy (lane-dense, generation-aware tiles)
# ----------------------------------------------------------------------------
@functools.lru_cache(maxsize=None)
def _fallback_params():
    """(block_bytes, vmem_limit_bytes) tuned per TPU generation."""
    try:
        vmem_bytes = int(pltpu.get_tpu_info().vmem_capacity_bytes)
    except Exception:
        vmem_bytes = 64 * 1024 * 1024
    if vmem_bytes >= 100 * 1024 * 1024:
        # v5e / v6e (128 MiB VMEM): 8 MiB blocks amortize the ~0.35 us/step
        # pipeline overhead down to ~2-3% of step time.
        return 8 * 1024 * 1024, 64 * 1024 * 1024
    # v7x (64 MiB VMEM per TC): 4 MiB blocks -> ~16 MiB live (in+out, double
    # buffered) + compiler scratch headroom.
    return 4 * 1024 * 1024, 40 * 1024 * 1024


def _vmem_copy_kernel(x_ref, o_ref):
    o_ref[...] = x_ref[...]


@functools.lru_cache(maxsize=None)
def _build_tiled_copy(shape, block, grid, dtype_name, vmem_limit):
    dtype = jnp.dtype(dtype_name)
    if len(shape) == 2:
        index_map = lambda i: (i, 0)
    else:
        index_map = lambda i: (i,)
    return pl.pallas_call(
        _vmem_copy_kernel,
        out_shape=jax.ShapeDtypeStruct(shape, dtype),
        grid_spec=pltpu.PrefetchScalarGridSpec(
            num_scalar_prefetch=0,
            grid=grid,
            in_specs=[pl.BlockSpec(block, index_map)],
            out_specs=pl.BlockSpec(block, index_map),
        ),
        compiler_params=pltpu.CompilerParams(
            dimension_semantics=("parallel",),    # shard across TCs on v7x
            vmem_limit_bytes=vmem_limit,
        ),
    )


def _tiled_vmem_copy(flat, total):
    dtype = flat.dtype
    itemsize = jnp.dtype(dtype).itemsize
    sub = _sublane(dtype)
    tile_bytes, vmem_limit = _fallback_params()

    # Widest lane-dense last dim: 128*k (k<=16) dividing total -> unmasked vst.
    wide = None
    if total % _LANE == 0:
        for k in range(16, 0, -1):
            if total % (_LANE * k) == 0:
                wide = _LANE * k
                break

    if wide is not None:
        rows = total // wide
        x = flat.reshape(rows, wide)
        t_rows = max(sub, (tile_bytes // (wide * itemsize)) // sub * sub)
        if rows > t_rows:
            block, grid = (t_rows, wide), (-(-rows // t_rows),)   # ragged last block
        elif rows >= 2 * sub and total * itemsize >= 2 * 1024 * 1024:
            # Keep >=2 grid steps so multi-TensorCore chips (v7x) can shard
            # the parallel axis; negligible cost on single-TC chips.
            t_rows = -(-((rows + 1) // 2) // sub) * sub
            block, grid = (t_rows, wide), (-(-rows // t_rows),)
        else:
            block, grid = (rows, wide), (1,)     # full-dim block (divisibility-exempt)
    else:
        # Element count not a multiple of 128: 1D stream, tile-aligned chunks.
        x = flat
        align = sub * _LANE
        chunk = max(align, (tile_bytes // itemsize) // align * align)
        if total <= chunk:
            block, grid = (total,), (1,)         # full-array block (exempt)
        else:
            block, grid = (chunk,), (-(-total // chunk),)  # ragged last block
    out = _build_tiled_copy(tuple(x.shape), block, grid,
                            jnp.dtype(dtype).name, vmem_limit)(x)
    return out.reshape(-1)


# ----------------------------------------------------------------------------
# dispatcher + module
# ----------------------------------------------------------------------------
@functools.lru_cache(maxsize=None)
def _probe_path(name):
    """One-time capability probe on tiny CONCRETE dummy data.

    jit-safe: never touches user tracers, so it genuinely exercises lowering,
    execution and values even when pallas_view itself is being traced.
    """
    try:
        n = 2048
        x = jnp.arange(n, dtype=jnp.float32)
        if name == "alias":
            out = _alias_identity(x, n)
        elif name == "dma":
            out = _dma_copy(x, n)
        else:
            return False
        out = jax.block_until_ready(out)
        return bool(jnp.array_equal(out, x))
    except Exception:
        return False


def _identity_copy(flat, total):
    if _probe_path("alias"):
        return _alias_identity(flat, total)
    if _probe_path("dma"):
        return _dma_copy(flat, total)
    return _tiled_vmem_copy(flat, total)


def pallas_view(x, dims):
    """Equivalent of `x.view(*dims)`; storage handling runs in a Pallas kernel."""
    total = int(x.size)
    out_dims = _resolve_dims(total, _normalize_dims(dims))
    if total == 0:
        return x.reshape(out_dims)
    flat = x.reshape(-1)                  # row-major flatten: metadata only
    out_flat = _identity_copy(flat, total)
    return out_flat.reshape(out_dims)     # target shape: metadata only


class View:
    """Mirror of the PyTorch module: View(*dims)(x) == x.view(*dims)."""

    def __init__(self, *argv):
        self.dims = argv

    def __call__(self, x):
        return pallas_view(x, self.dims)


if __name__ == "__main__":
    key = jax.random.PRNGKey(0)
    k0, k1, k2 = jax.random.split(key, 3)

    # Lane-aligned case with -1 inference: (2,4,16,16) -> (32, 64)
    x = jax.random.normal(k0, (2, 4, 16, 16), dtype=jnp.float32)
    out = jax.block_until_ready(View(-1, 64)(x))
    assert out.shape == (32, 64), out.shape
    assert out.dtype == x.dtype
    assert bool(jnp.all(out == x.reshape(32, 64))), "view mismatch (aligned path)"

    # Odd-sized (non lane-aligned) case: (3,5,7) -> (7, 15)
    y = jax.random.normal(k1, (3, 5, 7), dtype=jnp.float32)
    out2 = jax.block_until_ready(View(7, 15)(y))
    assert bool(jnp.all(out2 == y.reshape(7, 15))), "view mismatch (odd path)"

    # bf16 case (exercises dtype-aware sublane packing): (2,8,32) -> (4, 128)
    z = jax.random.normal(k2, (2, 8, 32), dtype=jnp.bfloat16)
    out3 = jax.block_until_ready(View(4, -1)(z))
    assert out3.shape == (4, 128) and out3.dtype == z.dtype
    assert bool(jnp.all(out3 == z.reshape(4, 128))), "view mismatch (bf16 path)"

    # jit-traced case (exercises tracer-safe path selection + aliasing).
    jitted = jax.jit(lambda a: View(8, -1)(a))
    out4 = jax.block_until_ready(jitted(x))
    assert out4.shape == (8, 256)
    assert bool(jnp.all(out4 == x.reshape(8, 256))), "view mismatch (jit path)"

    print("KERNEL_OK")
</pallas_src>

<mosaic_0001>
module attributes {stable_mosaic.version = 11 : i64} {
  func.func @_vmem_copy_kernel(%arg0: i32, %arg1: memref<1x2048xf32, #tpu.memory_space<vmem>>, %arg2: memref<1x2048xf32, #tpu.memory_space<vmem>>) attributes {dimension_semantics = [#tpu.dimension_semantics<parallel>], iteration_bounds = array<i64: 1>, scalar_prefetch = 0 : i64, scratch_operands = 0 : i64, tpu.core_type = #tpu.core_type<tc>, window_params = [{transform_indices = @transform_0, window_bounds = array<i64: 1, 2048>}, {transform_indices = @transform_1, window_bounds = array<i64: 1, 2048>}]} {
    %c0 = arith.constant 0 : index
    %c0_0 = arith.constant 0 : index
    %0 = vector.load %arg1[%c0, %c0_0] : memref<1x2048xf32, #tpu.memory_space<vmem>>, vector<1x2048xf32>
    %c0_1 = arith.constant 0 : index
    %c0_2 = arith.constant 0 : index
    %1 = vector.load %arg2[%c0_1, %c0_2] : memref<1x2048xf32, #tpu.memory_space<vmem>>, vector<1x2048xf32>
    tpu.vector_store %arg2[%c0_1, %c0_2], %0 {strides = array<i32>} : memref<1x2048xf32, #tpu.memory_space<vmem>>, vector<1x2048xf32>,
    return
  }
  func.func @transform_0(%arg0: i32) -> (i32, i32) {
    %c0_i32 = arith.constant 0 : i32
    %c0_i32_0 = arith.constant 0 : i32
    return %arg0, %c0_i32 : i32, i32
  }
  func.func @transform_1(%arg0: i32) -> (i32, i32) {
    %c0_i32 = arith.constant 0 : i32
    %c0_i32_0 = arith.constant 0 : i32
    return %arg0, %c0_i32 : i32, i32
  }
}

</mosaic_0001>

<llo_original>
// kernel: tpu_custom_call.1
$region0: #{tpu_custom_call.1}
  #allocation0 [shape = 'u32[]', space=smem, size = 0x4, offset = 0x4, fixed_abs, tag = 'smem constant byte address 0x4 - core index']
  #allocation1 [shape = 'u32[144,128]{1,0:T(1,128)}', space=vmem, size = 0x12000, scoped, tag = 'internal scratch']
  %s0 = inlined_call_operand.hbm [shape: f32[1,2048], index: 0, kind: input, shape index: {}]
  %s1 = inlined_call_operand.hbm [shape: f32[1,2048], index: 1, kind: output, shape index: {}]
  %s2 = sld [smem:[#allocation0]]
  $region18: #{tpu_custom_call.1} parent=0
    _
  %s4 = ssub.s32 1, %s2
  %s5 = scalar_select 0, %s4, %s2
  $region1: #{tpu_custom_call.1} parent=0
    #allocation2 [shape = 'u8[8192]{0}', space=vmem, size = 0x2000, scoped, tag = 'input window, operand 0, single buffered']
    #allocation3 [shape = 's32[1]{0}', space=sflag, size = 0x4, scoped, tag = 'scoped memory for tpu_custom_call.1']
    #allocation4 [shape = 's32[1]{0}', space=sflag, size = 0x4, scoped, tag = 'scoped memory for tpu_custom_call.1']
    #allocation5 [shape = 'u8[8192]{0}', space=vmem, size = 0x2000, scoped, tag = 'output window, operand 0, single buffered']
    %6 = vsyncpa [#allocation3], 0
    %7 = vsyncpa [#allocation4], 0
    // Predicated region
    $region2: #{tpu_custom_call.1} parent=1 // pred_check
      _
    $region3: #{tpu_custom_call.1} parent=1 // pred_check_branch
      %9 = sbr.rel (0) target = $region5
    $region4: #{tpu_custom_call.1} parent=1 // pred_region
      %s11 = ssub.s32 256, 256
      %12 = vsyncadd [#allocation3], %s11
      %s14 = sshll.u32 [#allocation2], 4
      %s15 = int_to_ptr.vmem [resolvable:$true] %s14
      %17 = dma.hbm_to_vmem [thread:$0]  %s0, 256, %s15, [#allocation3]
    $region5: #{tpu_custom_call.1} parent=1 // pred_fallthru
      _
    // Predicated region
    $region6: #{tpu_custom_call.1} parent=1 // pred_check
      _
    $region7: #{tpu_custom_call.1} parent=1 // pred_check_branch
      %19 = sbr.rel (0) target = $region9
    $region8: #{tpu_custom_call.1} parent=1 // pred_region
      %20 = dma.done [#allocation3], 256
    $region9: #{tpu_custom_call.1} parent=1 // pred_fallthru
      _
    %v21 = vld [vmem:[#allocation2] sm:$0xff]
    %v22 = vld [vmem:[#allocation2 + $0x8] sm:$0xff]
    %23 = vst [vmem:[#allocation5] sm:$0xff] %v21
    %24 = vst [vmem:[#allocation5 + $0x8] sm:$0xff] %v22
    // Predicated region
    $region10: #{tpu_custom_call.1} parent=1 // pred_check
      _
    $region11: #{tpu_custom_call.1} parent=1 // pred_check_branch
      %26 = sbr.rel (0) target = $region13
    $region12: #{tpu_custom_call.1} parent=1 // pred_region
      %s28 = ssub.s32 256, 256
      %29 = vsyncadd [#allocation4], %s28
      %s31 = sshll.u32 [#allocation5], 4
      %s32 = int_to_ptr.vmem [resolvable:$true] %s31
      %34 = dma.vmem_to_hbm [thread:$0]  %s32, 256, %s1, [#allocation4]
    $region13: #{tpu_custom_call.1} parent=1 // pred_fallthru
      _
    // Predicated region
    $region14: #{tpu_custom_call.1} parent=1 // pred_check
      _
    $region15: #{tpu_custom_call.1} parent=1 // pred_check_branch
      %36 = sbr.rel (0) target = $region17
    $region16: #{tpu_custom_call.1} parent=1 // pred_region
      %37 = dma.done [#allocation4], 256
    $region17: #{tpu_custom_call.1} parent=1 // pred_fallthru
      _
    %38 = vsyncpa [#allocation3], 1
    %39 = vsyncpa [#allocation4], 1

</llo_original>
